<compile_context>
chip_gen: v7x
topology: tpu7x:2x2x1
jax: 0.10.0
libtpu: 0.0.40
codegen_flags: <defaults>
</compile_context>

<pallas_src>
import jax
import jax.numpy as jnp
from jax.experimental import pallas as pl
from jax.experimental.pallas import tpu as pltpu


# ----------------------------- kernels --------------------------------------

def _fir_kernel_bias(x_ref, w_ref, b_ref, o_ref):
    # MXU matmul with f32 accumulation; bias added in f32 on the VPU.
    acc = jnp.dot(x_ref[...], w_ref[...], preferred_element_type=jnp.float32)
    acc = acc + b_ref[...]                  # b_ref is (1, tn) f32; broadcasts
    o_ref[...] = acc.astype(o_ref.dtype)


def _fir_kernel_nobias(x_ref, w_ref, o_ref):
    o_ref[...] = jnp.dot(
        x_ref[...], w_ref[...], preferred_element_type=jnp.float32
    ).astype(o_ref.dtype)


# ----------------------------- helpers --------------------------------------

def _round_up(n, m):
    return ((n + m - 1) // m) * m


def _vmem_budget():
    """Generation-aware (tile_budget_bytes, scoped_vmem_limit_bytes_or_None)."""
    try:
        cap = int(pltpu.get_tpu_info().vmem_capacity_bytes)
        if cap <= 0:
            raise ValueError("bad vmem capacity")
    except Exception:
        # Unknown generation: stay under every default scoped VMEM limit and
        # do not override vmem_limit_bytes.
        return 12 * 1024 * 1024, None
    # ~3/8 of physical VMEM for tiles (48 MiB on v5e/v6e, 24 MiB on v7x) and a
    # scoped limit of ~3/4 of physical (96 MiB / 48 MiB).
    budget = min(cap * 3 // 8, 48 * 1024 * 1024)
    limit = min(cap * 3 // 4, 96 * 1024 * 1024)
    return budget, limit


def _choose_tiles(batch, window, out_f, x_isz, w_isz, o_isz, budget, sub_m):
    """Pick (tm, tn).  tn first (lane-dense stores, resident weight panel),
    tm second.  Budget covers double-buffered x / w / out tiles plus the f32
    matmul intermediate.  Returns None if even minimal tiles do not fit (very
    large window -> caller falls back to XLA)."""
    ACC = 4                                               # f32 intermediate

    def need(tm, tn):
        return (2 * tm * window * x_isz                   # x double-buffer
                + 2 * window * tn * w_isz                 # weights double-buffer
                + 2 * tm * tn * o_isz                     # output double-buffer
                + tm * tn * ACC)                          # f32 dot/bias temp

    tm_min = batch if batch < sub_m else sub_m

    # --- tn: prefer a single full-width N block (weight DMA'd once, fewest
    # grid steps); otherwise the widest multiple of 128 that fits.
    if out_f <= 2048 and need(tm_min, out_f) <= budget:
        tn = out_f                                        # full dim -> legal block
    else:
        tn = max(128, min(2048, (out_f // 128) * 128))
        while tn > 128 and need(tm_min, tn) > budget:
            tn -= 128
        if need(tm_min, tn) > budget:
            return None

    # --- tm: as large as the budget allows, capped at batch and ~1024 rows.
    if batch < sub_m:
        tm = batch                                        # full-dim block (legal)
    else:
        tm = min(max(sub_m, (batch // sub_m) * sub_m), 1024)
        while tm > sub_m and need(tm, tn) > budget:
            tm -= sub_m
        if need(tm, tn) > budget:
            return None
    return tm, tn


# ----------------------------- wrapper --------------------------------------

def fir_layer(x, weights, bias=None, *, compute_dtype=None, force_pallas=False):
    """Pallas implementation of Fir_Layer.forward (eval mode, dropout=0).

    Args:
      x:             (batch, window, 1)
      weights:       (window, out_features)
      bias:          (out_features,) or None
      compute_dtype: optional operand dtype (e.g. jnp.bfloat16).  Only worth
                     using when x already arrives in that dtype (or the cast
                     fuses upstream); f32 accumulation is always kept.
      force_pallas:  skip the small-problem jnp.dot fallback (for testing).
    Returns:
      (batch, 1, out_features)
    """
    assert x.ndim == 3 and x.shape[-1] == 1, "expected (batch, window, 1) input"
    batch, window, _ = x.shape
    w_in, out_features = weights.shape
    assert w_in == window

    out_dtype = x.dtype
    x2d = x.reshape(batch, window)          # squeeze(-1): metadata only
    w = weights
    b32 = None
    if bias is not None:
        b32 = jnp.asarray(bias, jnp.float32).reshape(1, out_features)

    def _xla_fallback():
        y = jnp.dot(x2d, w, preferred_element_type=jnp.float32)
        if b32 is not None:
            y = y + b32
        return y.astype(out_dtype).reshape(batch, 1, out_features)

    # Tiny problems: custom-call launch + per-step overhead dominates; XLA wins.
    if (batch * window * out_features) < (1 << 16) and not force_pallas:
        return _xla_fallback()

    # Optional low-precision operands (changes numerics; accumulation stays f32).
    if compute_dtype is not None:
        if x2d.dtype != jnp.dtype(compute_dtype):
            x2d = x2d.astype(compute_dtype)
        if w.dtype != jnp.dtype(compute_dtype):
            w = w.astype(compute_dtype)

    x_isz = jnp.dtype(x2d.dtype).itemsize
    w_isz = jnp.dtype(w.dtype).itemsize
    o_isz = jnp.dtype(out_dtype).itemsize
    sub_m = {1: 32, 2: 16}.get(x_isz, 8)    # packed sublanes per M tile

    budget, vmem_limit = _vmem_budget()
    tiles = _choose_tiles(batch, window, out_features, x_isz, w_isz, o_isz,
                          budget, sub_m)
    if tiles is None:
        # TODO(synk): a very large window would need a K-reduction grid axis
        # with an f32 VMEM accumulator; not needed for FIR-sized windows.
        return _xla_fallback()
    tm, tn = tiles
    grid = (pl.cdiv(batch, tm), pl.cdiv(out_features, tn))

    b_bytes = 0 if b32 is None else 4 * out_features
    cost = pl.CostEstimate(
        flops=2 * batch * window * out_features,
        transcendentals=0,
        bytes_accessed=(x_isz * batch * window
                        + w_isz * window * out_features
                        + b_bytes
                        + o_isz * batch * out_features),
    )

    in_specs = [
        pl.BlockSpec((tm, window), lambda i, j: (i, 0)),   # x tile
        # Weight panel; index (0, j) is constant across batch tiles, so with a
        # single N block (the common case) the panel is DMA'd once.
        pl.BlockSpec((window, tn), lambda i, j: (0, j)),
    ]
    operands = [x2d, w]
    kernel = _fir_kernel_nobias
    if b32 is not None:
        in_specs.append(pl.BlockSpec((1, tn), lambda i, j: (0, j)))
        operands.append(b32)
        kernel = _fir_kernel_bias

    cp_kwargs = dict(dimension_semantics=("parallel", "parallel"))
    if vmem_limit is not None:
        cp_kwargs["vmem_limit_bytes"] = int(vmem_limit)

    out2d = pl.pallas_call(
        kernel,
        out_shape=jax.ShapeDtypeStruct((batch, out_features), out_dtype),
        grid=grid,
        in_specs=in_specs,
        out_specs=pl.BlockSpec((tm, tn), lambda i, j: (i, j)),
        compiler_params=pltpu.CompilerParams(**cp_kwargs),
        cost_estimate=cost,
    )(*operands)

    return out2d.reshape(batch, 1, out_features)
    # TODO(synk): nn.Dropout(p>0) in training mode is stochastic; omitted (eval / p=0).


# ------------------------------- test ----------------------------------------

if __name__ == "__main__":
    key = jax.random.PRNGKey(0)
    kx, kw, kb, kx2, kw2, kx3, kw3 = jax.random.split(key, 7)

    # Case 1: canonical tiny shape, bias, force the Pallas path (single block,
    # every block dim equals the full array dim).
    batch, window, out_features = 2, 16, 32
    x = jax.random.normal(kx, (batch, window, 1), dtype=jnp.float32)
    weights = jax.random.normal(kw, (window, out_features), dtype=jnp.float32) * 0.1
    bias = jax.random.normal(kb, (out_features,), dtype=jnp.float32) * 0.1

    y = fir_layer(x, weights, bias, force_pallas=True)
    jax.block_until_ready(y)
    y_ref = (x.reshape(batch, window) @ weights).reshape(batch, 1, out_features) + bias
    assert y.shape == (batch, 1, out_features)
    assert jnp.allclose(y, y_ref, atol=1e-5, rtol=1e-5)

    # Case 2: moderate shape, no bias, batch multiple of 8, F not lane-aligned
    # (masked stores, no padding / slicing in the wrapper).
    b2, w2, f2 = 96, 24, 40
    x2 = jax.random.normal(kx2, (b2, w2, 1), dtype=jnp.float32)
    wt2 = jax.random.normal(kw2, (w2, f2), dtype=jnp.float32) * 0.1
    y2 = fir_layer(x2, wt2, None, force_pallas=True)
    jax.block_until_ready(y2)
    y2_ref = (x2.reshape(b2, w2) @ wt2).reshape(b2, 1, f2)
    assert y2.shape == (b2, 1, f2)
    assert jnp.allclose(y2, y2_ref, atol=1e-5, rtol=1e-5)

    # Case 3: ragged last M block (batch not a multiple of 8), bias.
    b3, w3, f3 = 50, 12, 72
    x3 = jax.random.normal(kx3, (b3, w3, 1), dtype=jnp.float32)
    wt3 = jax.random.normal(kw3, (w3, f3), dtype=jnp.float32) * 0.1
    bi3 = jnp.linspace(-0.5, 0.5, f3, dtype=jnp.float32)
    y3 = fir_layer(x3, wt3, bi3, force_pallas=True)
    jax.block_until_ready(y3)
    y3_ref = (x3.reshape(b3, w3) @ wt3).reshape(b3, 1, f3) + bi3
    assert y3.shape == (b3, 1, f3)
    assert jnp.allclose(y3, y3_ref, atol=1e-5, rtol=1e-5)

    # Case 4: small-problem dispatch (jnp.dot path) still matches.
    y4 = fir_layer(x, weights, bias)
    jax.block_until_ready(y4)
    assert jnp.allclose(y4, y_ref, atol=1e-5, rtol=1e-5)

    print("KERNEL_OK")
</pallas_src>

<mosaic_0001>
module attributes {stable_mosaic.version = 11 : i64} {
  func.func @_fir_kernel_bias(%arg0: i32, %arg1: i32, %arg2: memref<2x16xf32, #tpu.memory_space<vmem>>, %arg3: memref<16x32xf32, #tpu.memory_space<vmem>>, %arg4: memref<1x32xf32, #tpu.memory_space<vmem>>, %arg5: memref<2x32xf32, #tpu.memory_space<vmem>>) attributes {dimension_semantics = [#tpu.dimension_semantics<parallel>, #tpu.dimension_semantics<parallel>], iteration_bounds = array<i64: 1, 1>, scalar_prefetch = 0 : i64, scratch_operands = 0 : i64, tpu.core_type = #tpu.core_type<tc>, window_params = [{transform_indices = @transform_0, window_bounds = array<i64: 2, 16>}, {transform_indices = @transform_1, window_bounds = array<i64: 16, 32>}, {transform_indices = @transform_2, window_bounds = array<i64: 1, 32>}, {transform_indices = @transform_3, window_bounds = array<i64: 2, 32>}]} {
    %c0 = arith.constant 0 : index
    %c0_0 = arith.constant 0 : index
    %0 = vector.load %arg2[%c0, %c0_0] : memref<2x16xf32, #tpu.memory_space<vmem>>, vector<2x16xf32>
    %c0_1 = arith.constant 0 : index
    %c0_2 = arith.constant 0 : index
    %1 = vector.load %arg3[%c0_1, %c0_2] : memref<16x32xf32, #tpu.memory_space<vmem>>, vector<16x32xf32>
    %cst = arith.constant dense<0.000000e+00> : vector<2x32xf32>
    %2 = tpu.matmul %0, %1, %cst {dimension_numbers = #tpu.dot_dimension_numbers<[1], [0], [0], [1], [0, 0, 1, 1], [], []>} : vector<2x16xf32>, vector<16x32xf32>, vector<2x32xf32> -> vector<2x32xf32>
    %c0_3 = arith.constant 0 : index
    %c0_4 = arith.constant 0 : index
    %3 = vector.load %arg4[%c0_3, %c0_4] : memref<1x32xf32, #tpu.memory_space<vmem>>, vector<1x32xf32>
    %4 = vector.broadcast %3 : vector<1x32xf32> to vector<2x32xf32>
    %5 = arith.addf %2, %4 : vector<2x32xf32>
    %c0_5 = arith.constant 0 : index
    %c0_6 = arith.constant 0 : index
    %6 = vector.load %arg5[%c0_5, %c0_6] : memref<2x32xf32, #tpu.memory_space<vmem>>, vector<2x32xf32>
    tpu.vector_store %arg5[%c0_5, %c0_6], %5 {strides = array<i32>} : memref<2x32xf32, #tpu.memory_space<vmem>>, vector<2x32xf32>,
    return
  }
  func.func @transform_0(%arg0: i32, %arg1: i32) -> (i32, i32) {
    %c0_i32 = arith.constant 0 : i32
    %c0_i32_0 = arith.constant 0 : i32
    return %arg0, %c0_i32 : i32, i32
  }
  func.func @transform_1(%arg0: i32, %arg1: i32) -> (i32, i32) {
    %c0_i32 = arith.constant 0 : i32
    %c0_i32_0 = arith.constant 0 : i32
    return %c0_i32, %arg1 : i32, i32
  }
  func.func @transform_2(%arg0: i32, %arg1: i32) -> (i32, i32) {
    %c0_i32 = arith.constant 0 : i32
    %c0_i32_0 = arith.constant 0 : i32
    return %c0_i32, %arg1 : i32, i32
  }
  func.func @transform_3(%arg0: i32, %arg1: i32) -> (i32, i32) {
    %c0_i32 = arith.constant 0 : i32
    return %arg0, %arg1 : i32, i32
  }
}

</mosaic_0001>

<llo_original>
// kernel: tpu_custom_call.1
$region0: #{tpu_custom_call.1}
  #allocation0 [shape = 'u32[]', space=smem, size = 0x4, offset = 0x4, fixed_abs, tag = 'smem constant byte address 0x4 - core index']
  #allocation1 [shape = 'u32[144,128]{1,0:T(1,128)}', space=vmem, size = 0x12000, scoped, tag = 'internal scratch']
  %s0 = inlined_call_operand.hbm [shape: f32[2,16], index: 0, kind: input, shape index: {}]
  %s1 = inlined_call_operand.hbm [shape: f32[16,32], index: 1, kind: input, shape index: {}]
  %s2 = inlined_call_operand.vmem [shape: f32[1,32], index: 2, kind: input, shape index: {}]
  %s3 = inlined_call_operand.hbm [shape: f32[2,32], index: 3, kind: output, shape index: {}]
  %s4 = sld [smem:[#allocation0]]
  $region30: #{tpu_custom_call.1} parent=0
    _
  %s6 = ssub.s32 1, %s4
  %s7 = scalar_select 0, %s6, %s4
  $region1: #{tpu_custom_call.1} parent=0
    #allocation2 [shape = 'u8[1024]{0}', space=vmem, size = 0x400, scoped, tag = 'input window, operand 0, single buffered']
    #allocation3 [shape = 's32[1]{0}', space=sflag, size = 0x4, scoped, tag = 'scoped memory for tpu_custom_call.1']
    #allocation4 [shape = 's32[1]{0}', space=sflag, size = 0x4, scoped, tag = 'scoped memory for tpu_custom_call.1']
    #allocation5 [shape = 'u8[8192]{0}', space=vmem, size = 0x2000, scoped, tag = 'input window, operand 1, single buffered']
    #allocation6 [shape = 's32[1]{0}', space=sflag, size = 0x4, scoped, tag = 'scoped memory for tpu_custom_call.1']
    #allocation7 [shape = 'u8[1024]{0}', space=vmem, size = 0x400, scoped, tag = 'output window, operand 0, single buffered']
    %8 = vsyncpa [#allocation3], 0
    %9 = vsyncpa [#allocation6], 0
    %10 = vsyncpa [#allocation4], 0
    // Predicated region
    $region2: #{tpu_custom_call.1} parent=1 // pred_check
      _
    $region3: #{tpu_custom_call.1} parent=1 // pred_check_branch
      %12 = sbr.rel (0) target = $region5
    $region4: #{tpu_custom_call.1} parent=1 // pred_region
      %s14 = ssub.s32 32, 32
      %15 = vsyncadd [#allocation3], %s14
      %s17 = sshll.u32 [#allocation2], 4
      %s18 = int_to_ptr.vmem [resolvable:$true] %s17
      %20 = dma.hbm_to_vmem [thread:$0]  %s0, 32, %s18, [#allocation3]
    $region5: #{tpu_custom_call.1} parent=1 // pred_fallthru
      _
    // Predicated region
    $region6: #{tpu_custom_call.1} parent=1 // pred_check
      _
    $region7: #{tpu_custom_call.1} parent=1 // pred_check_branch
      %22 = sbr.rel (0) target = $region9
    $region8: #{tpu_custom_call.1} parent=1 // pred_region
      %s24 = ssub.s32 256, 256
      %25 = vsyncadd [#allocation6], %s24
      %s26 = sshll.u32 [#allocation5], 4
      %s27 = int_to_ptr.vmem [resolvable:$true] %s26
      %32 = dma.hbm_to_vmem [thread:$0]  %s1, 256, %s27, [#allocation6], 128, 128, 8
    $region9: #{tpu_custom_call.1} parent=1 // pred_fallthru
      _
    // Predicated region
    $region10: #{tpu_custom_call.1} parent=1 // pred_check
      _
    $region11: #{tpu_custom_call.1} parent=1 // pred_check_branch
      %34 = sbr.rel (0) target = $region13
    $region12: #{tpu_custom_call.1} parent=1 // pred_region
      _
    $region13: #{tpu_custom_call.1} parent=1 // pred_fallthru
      _
    // Predicated region
    $region14: #{tpu_custom_call.1} parent=1 // pred_check
      _
    $region15: #{tpu_custom_call.1} parent=1 // pred_check_branch
      %36 = sbr.rel (0) target = $region17
    $region16: #{tpu_custom_call.1} parent=1 // pred_region
      %37 = dma.done [#allocation3], 32
    $region17: #{tpu_custom_call.1} parent=1 // pred_fallthru
      _
    // Predicated region
    $region18: #{tpu_custom_call.1} parent=1 // pred_check
      _
    $region19: #{tpu_custom_call.1} parent=1 // pred_check_branch
      %39 = sbr.rel (0) target = $region21
    $region20: #{tpu_custom_call.1} parent=1 // pred_region
      %40 = dma.done [#allocation6], 256
    $region21: #{tpu_custom_call.1} parent=1 // pred_fallthru
      _
    %v41 = vld [vmem:[#allocation2] sm:$0x3]
    %v42 = vld [vmem:[#allocation5] sm:$0xff]
    %v43 = vld [vmem:[#allocation5 + $0x8] sm:$0xff]
    %v44 = vld [vmem:[%s2] sm:$0x1]
    %v46 = vlaneseq
    %v47 = vshrl.u32 %v46, 7
    %v48 = vsub.s32 0, %v47
    %v49 = vrot.slane %v44, %v48
    %vm51 = vcmask 130048
    %v53 = vsel %vm51, %v41, 0
    %55 = vmatprep.subr.mxu0 0.0
    %56 = vmatpush1.msra.mxu0 %v42
    %57 = vmatprep.subr.mxu0 0.0
    %58 = vmatpush1.msra.mxu0 %v43
    %59 = vmatprep.subr.mxu0 0.0
    %60 = vmatpush1.msra.mxu0 0.0
    %61 = vmatprep.subr.mxu0 0.0
    %62 = vmatpush1.msra.mxu0 0.0
    %63 = vmatprep.subr.mxu0 0.0
    %64 = vmatpush1.msra.mxu0 0.0
    %65 = vmatprep.subr.mxu0 0.0
    %66 = vmatpush1.msra.mxu0 0.0
    %67 = vmatprep.subr.mxu0 0.0
    %68 = vmatpush1.msra.mxu0 0.0
    %69 = vmatprep.subr.mxu0 0.0
    %70 = vmatpush1.msra.mxu0 0.0
    %71 = vmatprep.subr.mxu0 0.0
    %72 = vmatpush1.msra.mxu0 0.0
    %73 = vmatprep.subr.mxu0 0.0
    %74 = vmatpush1.msra.mxu0 0.0
    %75 = vmatprep.subr.mxu0 0.0
    %76 = vmatpush1.msra.mxu0 0.0
    %77 = vmatprep.subr.mxu0 0.0
    %78 = vmatpush1.msra.mxu0 0.0
    %79 = vmatprep.subr.mxu0 0.0
    %80 = vmatpush1.msra.mxu0 0.0
    %81 = vmatprep.subr.mxu0 0.0
    %82 = vmatpush1.msra.mxu0 0.0
    %83 = vmatprep.subr.mxu0 0.0
    %84 = vmatpush1.msra.mxu0 0.0
    %85 = vmatprep.subr.mxu0 0.0
    %86 = vmatpush1.msra.mxu0 0.0
    %87 = vmatprep.subr.mxu0 0.0
    %88 = vmatpush1.msra.mxu0 0.0
    %89 = vmatprep.subr.mxu0 0.0
    %90 = vmatpush1.msra.mxu0 0.0
    %91 = vmatprep.subr.mxu0 0.0
    %92 = vmatpush1.msra.mxu0 0.0
    %93 = vmatprep.subr.mxu0 0.0
    %94 = vmatpush1.msra.mxu0 0.0
    %95 = vmatprep.subr.mxu0 0.0
    %96 = vmatpush1.msra.mxu0 0.0
    %97 = vmatprep.subr.mxu0 0.0
    %98 = vmatpush1.msra.mxu0 0.0
    %99 = vmatprep.subr.mxu0 0.0
    %100 = vmatpush1.msra.mxu0 0.0
    %101 = vmatprep.subr.mxu0 0.0
    %102 = vmatpush1.msra.mxu0 0.0
    %103 = vmatprep.subr.mxu0 0.0
    %104 = vmatpush1.msra.mxu0 0.0
    %105 = vmatprep.subr.mxu0 0.0
    %106 = vmatpush1.msra.mxu0 0.0
    %107 = vmatprep.subr.mxu0 0.0
    %108 = vmatpush1.msra.mxu0 0.0
    %109 = vmatprep.subr.mxu0 0.0
    %110 = vmatpush1.msra.mxu0 0.0
    %111 = vmatprep.subr.mxu0 0.0
    %112 = vmatpush1.msra.mxu0 0.0
    %113 = vmatprep.subr.mxu0 0.0
    %114 = vmatpush1.msra.mxu0 0.0
    %115 = vmatprep.subr.mxu0 0.0
    %116 = vmatpush1.msra.mxu0 0.0
    %117 = vmatprep.subr.mxu0 0.0
    %118 = vmatpush1.msra.mxu0 0.0
    %119 = vmatprep.mubr.f32.mxu0 0.0
    %120 = vmatmul.mubr.f32.gmra.mrb[0].mxu0 %v53
    %v121 = vpop.f32.mrb[0].mxu0
    %v122 = vadd.f32 %v49, %v121
    %v123 = vpop.f32.mrb[0].mxu0
    %124 = vdwg.mxu0
    %vm125 = vcmask 254976
    %126 = vst.msk [vmem:[#allocation7] sm:$0x3] %vm125, %v122
    // Predicated region
    $region22: #{tpu_custom_call.1} parent=1 // pred_check
      _
    $region23: #{tpu_custom_call.1} parent=1 // pred_check_branch
      %128 = sbr.rel (0) target = $region25
    $region24: #{tpu_custom_call.1} parent=1 // pred_region
      %s130 = ssub.s32 32, 32
      %131 = vsyncadd [#allocation4], %s130
      %s133 = sshll.u32 [#allocation7], 4
      %s134 = int_to_ptr.vmem [resolvable:$true] %s133
      %136 = dma.vmem_to_hbm [thread:$0]  %s134, 32, %s3, [#allocation4]
    $region25: #{tpu_custom_call.1} parent=1 // pred_fallthru
      _
    // Predicated region
    $region26: #{tpu_custom_call.1} parent=1 // pred_check
      _
    $region27: #{tpu_custom_call.1} parent=1 // pred_check_branch
      %138 = sbr.rel (0) target = $region29
    $region28: #{tpu_custom_call.1} parent=1 // pred_region
      %139 = dma.done [#allocation4], 32
    $region29: #{tpu_custom_call.1} parent=1 // pred_fallthru
      _
    %140 = vsyncpa [#allocation3], 1
    %141 = vsyncpa [#allocation6], 1
    %142 = vsyncpa [#allocation4], 1

</llo_original>
